<compile_context>
chip_gen: v5e
topology: v5e:2x2
jax: 0.10.0
libtpu: 0.0.40
codegen_flags: <defaults>
</compile_context>

<pallas_src>
import math

import jax
import jax.numpy as jnp
from jax.experimental import pallas as pl
from jax.experimental.pallas import tpu as pltpu

_LANE = 128


def _cdiv(a, b):
    return (a + b - 1) // b


def _round_up(n, m):
    return ((n + m - 1) // m) * m


# ------------------------------- Pallas kernel -------------------------------

def _drop_path_kernel(scale_ref, x_ref, o_ref):
    """o = x * scale[b]; f32 math, single cast on the store."""
    o_ref[...] = (x_ref[...].astype(jnp.float32) * scale_ref[...]).astype(o_ref.dtype)


# --------------------------------- wrapper -----------------------------------

def drop_path(x, key, drop_prob=0.0, training=False, *, target_block_bytes=2 << 20):
    """Pallas implementation of drop_path_f / DropPath.forward."""
    if drop_prob == 0.0 or not training:
        return x                                   # identity: no kernel launch

    keep_prob = 1.0 - float(drop_prob)
    B = x.shape[0]
    feat = math.prod(x.shape[1:])
    itemsize = jnp.dtype(x.dtype).itemsize
    # sublane granularity incl. dtype packing (f32: 8, bf16: 16, int8: 32)
    sub = 8 * max(1, 4 // itemsize)

    # Per-sample keep mask folded with 1/keep_prob into one f32 scale.
    # TODO(synk): mask is drawn with jax.random (not torch.rand), so the RNG
    # stream differs from PyTorch bit-for-bit; the Bernoulli semantics match.
    u = jax.random.uniform(key, (B,), jnp.float32)
    scale = jnp.floor(keep_prob + u) * (1.0 / keep_prob)     # (B,) of {0, 1/keep_prob}

    if feat % _LANE == 0:
        # Lane- and sublane-dense view (B, rows, 128); reshape is free.
        rows = feat // _LANE
        tr_target = max(sub, (target_block_bytes // (_LANE * itemsize)) // sub * sub)
        tr = rows if rows <= tr_target else tr_target
        n_row = _cdiv(rows, tr)
        if B * n_row < 2 and rows >= 2 * sub:      # v7x: give both TensorCores work
            tr = _round_up(_cdiv(rows, 2), sub)
            n_row = _cdiv(rows, tr)
        grid = (B, n_row)
        x_view = x.reshape(B, rows, _LANE)
        scale_in = scale.reshape(B, 1, 1)
        in_specs = [pl.BlockSpec((1, 1, 1), lambda b, r: (b, 0, 0)),
                    pl.BlockSpec((1, tr, _LANE), lambda b, r: (b, r, 0))]
        out_spec = pl.BlockSpec((1, tr, _LANE), lambda b, r: (b, r, 0))
        out_shape = jax.ShapeDtypeStruct((B, rows, _LANE), x.dtype)
        semantics = ("parallel", "parallel")
    else:
        # Ragged feature count: 2-D view (B, feat); tile the feature axis with
        # 128-multiple blocks; the final block may be partial (masked store),
        # so no pad / slice passes are needed.
        b_pad = _round_up(B, sub)                  # sublane padding inside VMEM
        tf_target = max(_LANE,
                        (target_block_bytes // (b_pad * itemsize)) // _LANE * _LANE)
        if feat > tf_target:
            tf = tf_target
        elif feat >= 2 * _LANE:                    # v7x: at least 2 parallel blocks
            tf = _round_up(_cdiv(feat, 2), _LANE)
        else:
            tf = feat                              # tiny input: one full block
        grid = (_cdiv(feat, tf),)
        x_view = x.reshape(B, feat)
        scale_in = scale.reshape(B, 1)
        in_specs = [pl.BlockSpec((B, 1), lambda i: (0, 0)),
                    pl.BlockSpec((B, tf), lambda i: (0, i))]
        out_spec = pl.BlockSpec((B, tf), lambda i: (0, i))
        out_shape = jax.ShapeDtypeStruct((B, feat), x.dtype)
        semantics = ("parallel",)

    out = pl.pallas_call(
        _drop_path_kernel,
        out_shape=out_shape,
        grid=grid,
        in_specs=in_specs,
        out_specs=out_spec,
        compiler_params=pltpu.CompilerParams(dimension_semantics=semantics),
    )(scale_in, x_view)

    return out.reshape(x.shape)


# ----------------------------- pure-JAX reference ----------------------------

def drop_path_reference(x, key, drop_prob=0.0, training=False):
    if drop_prob == 0.0 or not training:
        return x
    keep_prob = 1.0 - drop_prob
    B = x.shape[0]
    u = jax.random.uniform(key, (B,), jnp.float32)
    mask = jnp.floor(keep_prob + u)
    shape = (B,) + (1,) * (x.ndim - 1)
    out = x.astype(jnp.float32) / keep_prob * mask.reshape(shape)
    return out.astype(x.dtype)


# ----------------------------------- main ------------------------------------

if __name__ == "__main__":
    key = jax.random.PRNGKey(0)
    k_x, k_mask, k_x2 = jax.random.split(key, 3)
    drop_prob = 0.25

    # 1) f32, feature count divisible by 128 (dense (B, rows, 128) path)
    x = jax.random.normal(k_x, (2, 4, 16, 16), jnp.float32)
    out = jax.block_until_ready(drop_path(x, k_mask, drop_prob, training=True))
    ref = drop_path_reference(x, k_mask, drop_prob, training=True)
    assert out.shape == x.shape
    assert jnp.allclose(out, ref, rtol=1e-6, atol=1e-6), (
        f"max abs err = {jnp.max(jnp.abs(out - ref))}")

    # 2) f32, feature count NOT a multiple of 128 (ragged 2-D path, no padding)
    x_odd = jax.random.normal(k_x2, (3, 5, 7, 9), jnp.float32)
    out_odd = jax.block_until_ready(drop_path(x_odd, k_mask, drop_prob, training=True))
    ref_odd = drop_path_reference(x_odd, k_mask, drop_prob, training=True)
    assert out_odd.shape == x_odd.shape
    assert jnp.allclose(out_odd, ref_odd, rtol=1e-6, atol=1e-6), (
        f"max abs err = {jnp.max(jnp.abs(out_odd - ref_odd))}")

    # 3) bf16 input (dtype-scaled tile, f32 compute inside the kernel)
    x_bf = x.astype(jnp.bfloat16)
    out_bf = jax.block_until_ready(drop_path(x_bf, k_mask, drop_prob, training=True))
    ref_bf = drop_path_reference(x_bf, k_mask, drop_prob, training=True)
    assert out_bf.dtype == jnp.bfloat16
    assert jnp.allclose(out_bf.astype(jnp.float32), ref_bf.astype(jnp.float32),
                        rtol=2e-2, atol=2e-2)

    # 4) identity paths (eval mode / drop_prob == 0): no kernel launch
    assert jnp.array_equal(drop_path(x, k_mask, drop_prob, training=False), x)
    assert jnp.array_equal(drop_path(x, k_mask, 0.0, training=True), x)

    print("KERNEL_OK")
</pallas_src>

<mosaic_0001>
module attributes {stable_mosaic.version = 11 : i64} {
  func.func @_drop_path_kernel(%arg0: i32, %arg1: i32, %arg2: memref<1x1x1xf32, #tpu.memory_space<vmem>>, %arg3: memref<1x8x128xf32, #tpu.memory_space<vmem>>, %arg4: memref<1x8x128xf32, #tpu.memory_space<vmem>>) attributes {dimension_semantics = [#tpu.dimension_semantics<parallel>, #tpu.dimension_semantics<parallel>], iteration_bounds = array<i64: 2, 1>, scalar_prefetch = 0 : i64, scratch_operands = 0 : i64, tpu.core_type = #tpu.core_type<tc>, window_params = [{transform_indices = @transform_0, window_bounds = array<i64: 1, 1, 1>}, {transform_indices = @transform_1, window_bounds = array<i64: 1, 8, 128>}, {transform_indices = @transform_2, window_bounds = array<i64: 1, 8, 128>}]} {
    %c0 = arith.constant 0 : index
    %c0_0 = arith.constant 0 : index
    %c0_1 = arith.constant 0 : index
    %0 = vector.load %arg3[%c0, %c0_0, %c0_1] : memref<1x8x128xf32, #tpu.memory_space<vmem>>, vector<1x8x128xf32>
    %c0_2 = arith.constant 0 : index
    %c0_3 = arith.constant 0 : index
    %c0_4 = arith.constant 0 : index
    %1 = vector.load %arg2[%c0_2, %c0_3, %c0_4] : memref<1x1x1xf32, #tpu.memory_space<vmem>>, vector<1x1x1xf32>
    %2 = vector.broadcast %1 : vector<1x1x1xf32> to vector<1x8x128xf32>
    %3 = arith.mulf %0, %2 : vector<1x8x128xf32>
    %c0_5 = arith.constant 0 : index
    %c0_6 = arith.constant 0 : index
    %c0_7 = arith.constant 0 : index
    %4 = vector.load %arg4[%c0_5, %c0_6, %c0_7] : memref<1x8x128xf32, #tpu.memory_space<vmem>>, vector<1x8x128xf32>
    tpu.vector_store %arg4[%c0_5, %c0_6, %c0_7], %3 {strides = array<i32>} : memref<1x8x128xf32, #tpu.memory_space<vmem>>, vector<1x8x128xf32>,
    return
  }
  func.func @transform_0(%arg0: i32, %arg1: i32) -> (i32, i32, i32) {
    %c0_i32 = arith.constant 0 : i32
    %c0_i32_0 = arith.constant 0 : i32
    %c0_i32_1 = arith.constant 0 : i32
    return %arg0, %c0_i32, %c0_i32_0 : i32, i32, i32
  }
  func.func @transform_1(%arg0: i32, %arg1: i32) -> (i32, i32, i32) {
    %c0_i32 = arith.constant 0 : i32
    %c0_i32_0 = arith.constant 0 : i32
    return %arg0, %arg1, %c0_i32 : i32, i32, i32
  }
  func.func @transform_2(%arg0: i32, %arg1: i32) -> (i32, i32, i32) {
    %c0_i32 = arith.constant 0 : i32
    %c0_i32_0 = arith.constant 0 : i32
    return %arg0, %arg1, %c0_i32 : i32, i32, i32
  }
}

</mosaic_0001>

<llo_original>
// kernel: tpu_custom_call.1
$region0: #{tpu_custom_call.1}
  #allocation0 [shape = 'u32[]', space=smem, size = 0x4, offset = 0x4, fixed_abs, tag = 'smem constant byte address 0x4 - core index']
  #allocation1 [shape = 'u32[72,128]{1,0:T(1,128)}', space=vmem, size = 0x9000, scoped, tag = 'internal scratch']
  %s0 = inlined_call_operand.vmem [shape: f32[2,1,1], index: 0, kind: input, shape index: {}]
  %s1 = inlined_call_operand.hbm [shape: f32[2,8,128], index: 1, kind: input, shape index: {}]
  %s2 = inlined_call_operand.hbm [shape: f32[2,8,128], index: 2, kind: output, shape index: {}]
  %s3 = sld [smem:[#allocation0]]
  $region45: #{tpu_custom_call.1} parent=0
    _
  %s5 = ssub.s32 1, %s3
  %s6 = scalar_select 0, %s5, %s3
  $region1: #{tpu_custom_call.1} parent=0
    #allocation2 [shape = 'u8[8192]{0}', space=vmem, size = 0x2000, scoped, tag = 'input window, operand 1']
    #allocation3 [shape = 's32[2]{0}', space=sflag, size = 0x8, scoped, tag = 'scoped memory for tpu_custom_call.1']
    #allocation4 [shape = 's32[2]{0}', space=sflag, size = 0x8, scoped, tag = 'scoped memory for tpu_custom_call.1']
    #allocation5 [shape = 'u8[8192]{0}', space=vmem, size = 0x2000, scoped, tag = 'output window, operand 0']
    %7 = vsyncpa [#allocation3], 0
    %s8 = scalar_lea.sflag [#allocation3], 1
    %9 = vsyncpa %s8, 0
    %10 = vsyncpa [#allocation4], 0
    %s11 = scalar_lea.sflag [#allocation4], 1
    %12 = vsyncpa %s11, 0
    loop: start=0, step=1, limit=4
    $region2: #{tpu_custom_call.1} parent=1 // loop_pre_header
      _
    $region3: #{tpu_custom_call.1} parent=1 // loop_header
      %s14 = sphi 0, %s18
      %p15 = scmp.ge.s32.totalorder %s14, 4
      %s21 = sphi 0, %s33
      %s22 = sphi 0, %s29
      %s23 = sphi 0, %s21
      %s24 = sphi 0, %s22
      %s25 = sphi 0, %s23
      %s26 = sphi 0, %s24
      %s36 = sphi 0, %s38
      %s39 = sphi 0, %s36
      %s40 = sphi 0, %s39
      %s56 = sphi 0, %s40
      %s64 = sphi 0, %s66
      %s67 = sphi 0, %s64
      %s68 = sphi 0, %s67
      %s84 = sphi 0, %s68
      %s92 = sphi 0, %s94
      %s95 = sphi 0, %s92
      %s96 = sphi 0, %s95
      %s112 = sphi 0, %s96
    $region4: #{tpu_custom_call.1} parent=1 // loop_header_branch
      %17 = sbr.rel (%p15) target = $region8
    $region5: #{tpu_custom_call.1} parent=1 // loop_body
      %s19 = ssub.s32 %s14, 1
      %s20 = ssub.s32 %s14, 2
      %s27 = sadd.s32 1, %s22
      %p28 = scmp.ge.s32.totalorder %s27, 1
      %s29 = scalar_select %p28, 0, %s27
      %s30 = sadd.s32 1, %s21
      %s31 = scalar_select %p28, %s30, %s21
      %p32 = scmp.ge.s32.totalorder %s31, 2
      %s33 = scalar_select %p32, 0, %s31
      %s34 = ssub.s32 %s21, %s33
      %p35 = scmp.eq.s32.totalorder %s34, 0
      %s37 = sadd.s32 %s36, 1
      %s38 = scalar_select %p35, %s36, %s37
      %p41 = pneg %p35
      %p42 = scmp.eq.s32.totalorder %s14, 1
      %p43 = por %p41, %p42
      %p44 = scmp.ne.s32.totalorder %s36, %s39
      %p45 = scmp.eq.s32.totalorder %s14, 0
      %p46 = por %p44, %p45
      %p47 = scmp.ne.s32.totalorder %s36, %s39
      %p48 = scmp.eq.s32.totalorder %s19, 1
      %p49 = por %p47, %p48
      %p50 = scmp.ne.s32.totalorder %s39, %s40
      %p51 = scmp.eq.s32.totalorder %s19, 0
      %p52 = por %p50, %p51
      %p53 = scmp.ne.s32.totalorder %s39, %s40
      %p54 = scmp.eq.s32.totalorder %s20, 1
      %p55 = por %p53, %p54
      %p57 = scmp.ne.s32.totalorder %s40, %s56
      %p58 = scmp.eq.s32.totalorder %s20, 0
      %p59 = por %p57, %p58
      %s60 = ssub.s32 %s21, %s33
      %s61 = ssub.s32 %s22, %s29
      %s62 = sor.u32 %s60, %s61
      %p63 = scmp.eq.s32.totalorder %s62, 0
      %s65 = sadd.s32 %s64, 1
      %s66 = scalar_select %p63, %s64, %s65
      %p69 = pneg %p63
      %p70 = scmp.eq.s32.totalorder %s14, 1
      %p71 = por %p69, %p70
      %p72 = scmp.ne.s32.totalorder %s64, %s67
      %p73 = scmp.eq.s32.totalorder %s14, 0
      %p74 = por %p72, %p73
      %p75 = scmp.ne.s32.totalorder %s64, %s67
      %p76 = scmp.eq.s32.totalorder %s19, 1
      %p77 = por %p75, %p76
      %p78 = scmp.ne.s32.totalorder %s67, %s68
      %p79 = scmp.eq.s32.totalorder %s19, 0
      %p80 = por %p78, %p79
      %p81 = scmp.ne.s32.totalorder %s67, %s68
      %p82 = scmp.eq.s32.totalorder %s20, 1
      %p83 = por %p81, %p82
      %p85 = scmp.ne.s32.totalorder %s68, %s84
      %p86 = scmp.eq.s32.totalorder %s20, 0
      %p87 = por %p85, %p86
      %s88 = ssub.s32 %s21, %s33
      %s89 = ssub.s32 %s22, %s29
      %s90 = sor.u32 %s88, %s89
      %p91 = scmp.eq.s32.totalorder %s90, 0
      %s93 = sadd.s32 %s92, 1
      %s94 = scalar_select %p91, %s92, %s93
      %p97 = pneg %p91
      %p98 = scmp.eq.s32.totalorder %s14, 1
      %p99 = por %p97, %p98
      %p100 = scmp.ne.s32.totalorder %s92, %s95
      %p101 = scmp.eq.s32.totalorder %s14, 0
      %p102 = por %p100, %p101
      %p103 = scmp.ne.s32.totalorder %s92, %s95
      %p104 = scmp.eq.s32.totalorder %s19, 1
      %p105 = por %p103, %p104
      %p106 = scmp.ne.s32.totalorder %s95, %s96
      %p107 = scmp.eq.s32.totalorder %s19, 0
      %p108 = por %p106, %p107
      %p109 = scmp.ne.s32.totalorder %s95, %s96
      %p110 = scmp.eq.s32.totalorder %s20, 1
      %p111 = por %p109, %p110
      %p113 = scmp.ne.s32.totalorder %s96, %s112
      %p114 = scmp.eq.s32.totalorder %s20, 0
      %p115 = por %p113, %p114
      %p116 = scmp.le.s32.totalorder 1, %s14
      %p117 = scmp.lt.s32.totalorder %s14, 3
      %p118 = pnand %p116, %p117
      %p119 = pneg %p118
      // Predicated region
      $region9: #{tpu_custom_call.1} parent=5 // pred_check
        _
      $region10: #{tpu_custom_call.1} parent=5 // pred_check_branch
        %121 = sbr.rel (%p118) target = $region12
      $region11: #{tpu_custom_call.1} parent=5 // pred_region
        %s122 = ssub.s32 %s14, 1
      $region12: #{tpu_custom_call.1} parent=5 // pred_fallthru
        _
      %p123 = scmp.lt.s32.totalorder %s14, 2
      // Predicated region
      $region13: #{tpu_custom_call.1} parent=5 // pred_check
        %p124 = pneg %p123
      $region14: #{tpu_custom_call.1} parent=5 // pred_check_branch
        %126 = sbr.rel (%p124) target = $region16
      $region15: #{tpu_custom_call.1} parent=5 // pred_region
        // Predicated region
        $region17: #{tpu_custom_call.1} parent=15 // pred_check
          %p127 = pneg %p46
        $region18: #{tpu_custom_call.1} parent=15 // pred_check_branch
          %129 = sbr.rel (%p127) target = $region20
        $region19: #{tpu_custom_call.1} parent=15 // pred_region
          %p130 = scmp.lt.s32.totalorder %s21, 1
          %s131 = scalar_select %p130, %s21, 1
          %s132 = scalar_lea.vmem %s0, %s131
        $region20: #{tpu_custom_call.1} parent=15 // pred_fallthru
          _
        // Predicated region
        $region21: #{tpu_custom_call.1} parent=15 // pred_check
          %p133 = pneg %p74
        $region22: #{tpu_custom_call.1} parent=15 // pred_check_branch
          %135 = sbr.rel (%p133) target = $region24
        $region23: #{tpu_custom_call.1} parent=15 // pred_region
          %s136 = sand.u32 %s64, 1
          %s137 = scalar_lea.sflag [#allocation3], %s136
          %s138 = sand.u32 %s64, 1
          %s139 = smul.addr %s138, 8
          %s140 = scalar_lea.vmem [#allocation2], %s139
          %142 = vsyncadd %s137, 0
          %s143 = sadd.s32 %s22, %s21
          %s144 = smul.addr %s143, 8
          %s145 = scalar_lea.hbm %s1, %s144
          %s147 = sshll.u32 %s145, 4
          %s148 = int_to_ptr.hbm [resolvable:$true] %s147
          %s149 = sshll.u32 %s140, 4
          %s150 = int_to_ptr.vmem [resolvable:$true] %s149
          %152 = dma.hbm_to_vmem [thread:$0]  %s148, 128, %s150, %s137
        $region24: #{tpu_custom_call.1} parent=15 // pred_fallthru
          _
      $region16: #{tpu_custom_call.1} parent=5 // pred_fallthru
        _
      %p153 = scmp.le.s32.totalorder 1, %s14
      %p154 = scmp.lt.s32.totalorder %s14, 3
      %p155 = pnand %p153, %p154
      %p156 = pneg %p155
      // Predicated region
      $region25: #{tpu_custom_call.1} parent=5 // pred_check
        _
      $region26: #{tpu_custom_call.1} parent=5 // pred_check_branch
        %158 = sbr.rel (%p155) target = $region28
      $region27: #{tpu_custom_call.1} parent=5 // pred_region
        %s159 = ssub.s32 %s14, 1
        %s160 = sand.u32 %s67, 1
        %s161 = scalar_lea.sflag [#allocation3], %s160
        %s162 = sand.u32 %s67, 1
        %s163 = smul.addr %s162, 8
        %s164 = scalar_lea.vmem [#allocation2], %s163
        // Predicated region
        $region29: #{tpu_custom_call.1} parent=27 // pred_check
          %p165 = pneg %p80
        $region30: #{tpu_custom_call.1} parent=27 // pred_check_branch
          %167 = sbr.rel (%p165) target = $region32
        $region31: #{tpu_custom_call.1} parent=27 // pred_region
          %169 = dma.done %s161, 128
        $region32: #{tpu_custom_call.1} parent=27 // pred_fallthru
          _
        %p170 = scmp.lt.s32.totalorder %s23, 1
        %s171 = scalar_select %p170, %s23, 1
        %s172 = scalar_lea.vmem %s0, %s171
        %p173 = pneg %p52
        %p174 = pneg %p49
        %s175 = sand.u32 %s67, 1
        %s176 = scalar_lea.sflag [#allocation3], %s175
        %s177 = sand.u32 %s67, 1
        %s178 = smul.addr %s177, 8
        %s179 = scalar_lea.vmem [#allocation2], %s178
        %p180 = pneg %p80
        %p181 = pneg %p77
        %p182 = pneg %p108
        %p183 = pneg %p105
        %s184 = sand.u32 %s95, 1
        %s185 = scalar_lea.sflag [#allocation4], %s184
        %s186 = sand.u32 %s95, 1
        %s187 = smul.addr %s186, 8
        %s188 = scalar_lea.vmem [#allocation5], %s187
        %p189 = scmp.lt.s32.totalorder %s23, 1
        %s190 = scalar_select %p189, %s23, 1
        %s191 = scalar_lea.vmem %s0, %s190
        %v192 = vld [vmem:[%s164] sm:$0xff]
        %v193 = vld [vmem:[%s191] sm:$0x1]
        %v195 = vperm.slane %v193, 0
        %196 = vset.pattern.permute.xlu0 0
        %197 = vperm.xlu0 %196, %v195
        %v198 = vpop.permute.xlu0 %197
        %v200 = vmul.f32 %v192, %v198
        %201 = vst [vmem:[%s188] sm:$0xff] %v200
        %s202 = sand.u32 %s95, 1
        %s203 = scalar_lea.sflag [#allocation4], %s202
        %s204 = sand.u32 %s95, 1
        %s205 = smul.addr %s204, 8
        %s206 = scalar_lea.vmem [#allocation5], %s205
        // Predicated region
        $region33: #{tpu_custom_call.1} parent=27 // pred_check
          %p207 = pneg %p105
        $region34: #{tpu_custom_call.1} parent=27 // pred_check_branch
          %209 = sbr.rel (%p207) target = $region36
        $region35: #{tpu_custom_call.1} parent=27 // pred_region
          %211 = vsyncadd %s203, 0
          %s212 = sadd.s32 %s24, %s23
          %s213 = smul.addr %s212, 8
          %s214 = scalar_lea.hbm %s2, %s213
          %s216 = sshll.u32 %s206, 4
          %s217 = int_to_ptr.vmem [resolvable:$true] %s216
          %s218 = sshll.u32 %s214, 4
          %s219 = int_to_ptr.hbm [resolvable:$true] %s218
          %221 = dma.vmem_to_hbm [thread:$0]  %s217, 128, %s219, %s203
        $region36: #{tpu_custom_call.1} parent=27 // pred_fallthru
          _
      $region28: #{tpu_custom_call.1} parent=5 // pred_fallthru
        _
      %p222 = scmp.le.s32.totalorder 2, %s14
      // Predicated region
      $region37: #{tpu_custom_call.1} parent=5 // pred_check
        %p223 = pneg %p222
      $region38: #{tpu_custom_call.1} parent=5 // pred_check_branch
        %225 = sbr.rel (%p223) target = $region40
      $region39: #{tpu_custom_call.1} parent=5 // pred_region
        %s226 = ssub.s32 %s14, 2
        // Predicated region
        $region41: #{tpu_custom_call.1} parent=39 // pred_check
          %p227 = pneg %p111
        $region42: #{tpu_custom_call.1} parent=39 // pred_check_branch
          %229 = sbr.rel (%p227) target = $region44
        $region43: #{tpu_custom_call.1} parent=39 // pred_region
          %s230 = sand.u32 %s96, 1
          %s231 = scalar_lea.sflag [#allocation4], %s230
          %s232 = sand.u32 %s96, 1
          %s233 = smul.addr %s232, 8
          %s234 = scalar_lea.vmem [#allocation5], %s233
          %236 = dma.done %s231, 128
        $region44: #{tpu_custom_call.1} parent=39 // pred_fallthru
          _
      $region40: #{tpu_custom_call.1} parent=5 // pred_fallthru
        _
    $region6: #{tpu_custom_call.1} parent=1 // loop_footer
      %s18 = sadd.s32 1, %s14
    $region7: #{tpu_custom_call.1} parent=1 // loop_footer_branch
      %13 = sbr.rel target = $region3
    $region8: #{tpu_custom_call.1} parent=1 // loop_exit
      _
    %237 = vsyncpa [#allocation3], 1
    %s238 = scalar_lea.sflag [#allocation3], 1
    %239 = vsyncpa %s238, 1
    %240 = vsyncpa [#allocation4], 1
    %s241 = scalar_lea.sflag [#allocation4], 1
    %242 = vsyncpa %s241, 1

</llo_original>
